<compile_context>
chip_gen: v7x
topology: tpu7x:2x2x1
jax: 0.10.0
libtpu: 0.0.40
codegen_flags: <defaults>
</compile_context>

<pallas_src>
import jax
import jax.numpy as jnp
from jax.experimental import pallas as pl
from jax.experimental.pallas import tpu as pltpu


def mru_kernel(x_ref, w_in_ref, b_in_ref, w_res_ref, b_res_ref,
               w_out_ref, b_out_ref, scale_ref, out_ref):
    # x_ref: (input_dim, tb)  -- batch lives in the 128-lane axis.
    # Input layer: (D, input_dim) @ (input_dim, tb) + (D, 1)
    x = jnp.dot(w_in_ref[...], x_ref[...],
                preferred_element_type=jnp.float32) + b_in_ref[...]

    # Residual (Linear + ReLU) units: x = relu(W_l @ x + b_l) + x
    num_res = w_res_ref.shape[0]
    for l in range(num_res):  # static unroll, traced once
        h = jnp.dot(w_res_ref[l], x,
                    preferred_element_type=jnp.float32) + b_res_ref[l]
        x = jnp.maximum(h, 0.0) + x

    # Reference tail (output Linear applied twice, with a (B,1)->(B,D)
    # broadcast-add in between) folded algebraically:
    #   y   = W_out @ x + b_out                      (1, tb)
    #   out = W_out @ (y_bcast + x) + b_out
    #       = y * sum(W_out) + (y - b_out) + b_out
    #       = y * (1 + sum(W_out))
    y = jnp.dot(w_out_ref[...], x,
                preferred_element_type=jnp.float32) + b_out_ref[...]
    out_ref[...] = y * scale_ref[0, 0]


def multi_residual_units(x, params, *, batch_block=512):
    """x: (B, input_dim) row-major (PyTorch Linear input). Returns (B, output_dim)."""
    w_in, b_in, w_res, b_res, w_out, b_out = params
    B, input_dim = x.shape
    out_dim = w_out.shape[0]
    # The reference forward's broadcast add (and our fold) require output_dim == 1.
    assert out_dim == 1, "MultiResidualUnits forward requires output_dim == 1"

    tb = min(batch_block, B)
    assert B % tb == 0, "batch must be divisible by the batch tile"
    grid = (B // tb,)

    # Feature-major layout: batch goes into the lane (last) dimension.
    xT = x.T  # (input_dim, B)

    # Hoisted constant for the folded duplicated output Linear.
    scale = (1.0 + jnp.sum(w_out)).reshape(1, 1).astype(jnp.float32)

    outT = pl.pallas_call(
        mru_kernel,
        out_shape=jax.ShapeDtypeStruct((out_dim, B), jnp.float32),
        grid_spec=pltpu.PrefetchScalarGridSpec(
            num_scalar_prefetch=0,
            grid=grid,
            in_specs=[
                pl.BlockSpec((input_dim, tb), lambda i: (0, i)),   # x tile (lane = batch)
                pl.BlockSpec(w_in.shape, lambda i: (0, 0)),        # W_in  (D, input_dim)
                pl.BlockSpec(b_in.shape, lambda i: (0, 0)),        # b_in  (D, 1)
                pl.BlockSpec(w_res.shape, lambda i: (0, 0, 0)),    # stacked residual W (L, D, D)
                pl.BlockSpec(b_res.shape, lambda i: (0, 0, 0)),    # stacked residual b (L, D, 1)
                pl.BlockSpec(w_out.shape, lambda i: (0, 0)),       # W_out (1, D)
                pl.BlockSpec(b_out.shape, lambda i: (0, 0)),       # b_out (1, 1)
                pl.BlockSpec(memory_space=pltpu.MemorySpace.SMEM), # scale scalar
            ],
            out_specs=pl.BlockSpec((out_dim, tb), lambda i: (0, i)),
        ),
        compiler_params=pltpu.CompilerParams(
            dimension_semantics=("parallel",)),
    )(xT, w_in, b_in, w_res, b_res, w_out, b_out, scale)

    return outT.T  # (B, out_dim)


def init_params(key, input_dim, embed_dims, output_dim):
    """Deterministic PyTorch-Linear-style init (uniform +-1/sqrt(fan_in)).
    Weights kept in native PyTorch layout (out_features, in_features);
    biases as (out_features, 1) columns (broadcast along the lane/batch axis)."""
    assert all(d == embed_dims[0] for d in embed_dims), \
        "residual adds require equal embed dims"
    d = embed_dims[0]
    n_res = len(embed_dims) - 1
    keys = jax.random.split(key, 2 + 2 * n_res + 2)

    def lin(kw, kb, fan_in, fan_out):
        bound = 1.0 / jnp.sqrt(fan_in)
        w = jax.random.uniform(kw, (fan_out, fan_in), jnp.float32, -bound, bound)
        b = jax.random.uniform(kb, (fan_out, 1), jnp.float32, -bound, bound)
        return w, b

    w_in, b_in = lin(keys[0], keys[1], input_dim, d)
    w_res_list, b_res_list = [], []
    for l in range(n_res):
        w, b = lin(keys[2 + 2 * l], keys[3 + 2 * l], d, d)
        w_res_list.append(w)
        b_res_list.append(b)
    w_res = jnp.stack(w_res_list, axis=0)   # (L, d, d)
    b_res = jnp.stack(b_res_list, axis=0)   # (L, d, 1)
    w_out, b_out = lin(keys[-2], keys[-1], d, output_dim)
    return w_in, b_in, w_res, b_res, w_out, b_out


def reference_forward(x, params):
    """Pure-JAX mirror of MultiResidualUnits.forward (batch-major, no folding)."""
    w_in, b_in, w_res, b_res, w_out, b_out = params
    x = x @ w_in.T + b_in[:, 0]
    for l in range(w_res.shape[0]):
        x = jnp.maximum(x @ w_res[l].T + b_res[l, :, 0], 0.0) + x
    x = (x @ w_out.T + b_out[:, 0]) + x     # last "residual" iteration (broadcast add)
    return x @ w_out.T + b_out[:, 0]        # output layer applied again


if __name__ == "__main__":
    key = jax.random.PRNGKey(0)
    k_x, k_p = jax.random.split(key)

    batch, input_dim = 512, 16
    embed_dims = [32, 32, 32]
    output_dim = 1

    x = jax.random.normal(k_x, (batch, input_dim), jnp.float32)
    params = init_params(k_p, input_dim, embed_dims, output_dim)

    # batch_block=256 -> grid=(2,), lane-dense tiles, both v7x TCs busy.
    out = multi_residual_units(x, params, batch_block=256)
    out = jax.block_until_ready(out)

    ref = reference_forward(x, params)
    assert out.shape == (batch, output_dim)
    # Folded output Linear is mathematically identical but not bit-exact.
    assert jnp.allclose(out, ref, atol=1e-4, rtol=1e-5), (out, ref)
    print("KERNEL_OK")
</pallas_src>

<mosaic_0001>
module attributes {stable_mosaic.version = 11 : i64} {
  func.func @mru_kernel(%arg0: i32, %arg1: memref<16x256xf32, #tpu.memory_space<vmem>>, %arg2: memref<32x16xf32, #tpu.memory_space<vmem>>, %arg3: memref<32x1xf32, #tpu.memory_space<vmem>>, %arg4: memref<2x32x32xf32, #tpu.memory_space<vmem>>, %arg5: memref<2x32x1xf32, #tpu.memory_space<vmem>>, %arg6: memref<1x32xf32, #tpu.memory_space<vmem>>, %arg7: memref<1x1xf32, #tpu.memory_space<vmem>>, %arg8: memref<1x1xf32, #tpu.memory_space<smem>>, %arg9: memref<1x256xf32, #tpu.memory_space<vmem>>) attributes {dimension_semantics = [#tpu.dimension_semantics<parallel>], iteration_bounds = array<i64: 2>, scalar_prefetch = 0 : i64, scratch_operands = 0 : i64, tpu.core_type = #tpu.core_type<tc>, window_params = [{transform_indices = @transform_0, window_bounds = array<i64: 16, 256>}, {pipeline_mode = #tpu.pipeline_mode<synchronous>, transform_indices = @transform_1, window_bounds = array<i64: 32, 16>}, {pipeline_mode = #tpu.pipeline_mode<synchronous>, transform_indices = @transform_2, window_bounds = array<i64: 32, 1>}, {pipeline_mode = #tpu.pipeline_mode<synchronous>, transform_indices = @transform_3, window_bounds = array<i64: 2, 32, 32>}, {pipeline_mode = #tpu.pipeline_mode<synchronous>, transform_indices = @transform_4, window_bounds = array<i64: 2, 32, 1>}, {pipeline_mode = #tpu.pipeline_mode<synchronous>, transform_indices = @transform_5, window_bounds = array<i64: 1, 32>}, {pipeline_mode = #tpu.pipeline_mode<synchronous>, transform_indices = @transform_6, window_bounds = array<i64: 1, 1>}, {transform_indices = @transform_7, window_bounds = array<i64: 1, 1>}, {transform_indices = @transform_8, window_bounds = array<i64: 1, 256>}]} {
    %c0 = arith.constant 0 : index
    %c0_0 = arith.constant 0 : index
    %0 = vector.load %arg2[%c0, %c0_0] : memref<32x16xf32, #tpu.memory_space<vmem>>, vector<32x16xf32>
    %c0_1 = arith.constant 0 : index
    %c0_2 = arith.constant 0 : index
    %1 = vector.load %arg1[%c0_1, %c0_2] : memref<16x256xf32, #tpu.memory_space<vmem>>, vector<16x256xf32>
    %cst = arith.constant dense<0.000000e+00> : vector<32x256xf32>
    %2 = tpu.matmul %0, %1, %cst {dimension_numbers = #tpu.dot_dimension_numbers<[1], [0], [0], [1], [0, 0, 1, 1], [], []>} : vector<32x16xf32>, vector<16x256xf32>, vector<32x256xf32> -> vector<32x256xf32>
    %c0_3 = arith.constant 0 : index
    %c0_4 = arith.constant 0 : index
    %3 = vector.load %arg3[%c0_3, %c0_4] : memref<32x1xf32, #tpu.memory_space<vmem>>, vector<32x1xf32>
    %4 = vector.broadcast %3 : vector<32x1xf32> to vector<32x256xf32>
    %5 = arith.addf %2, %4 : vector<32x256xf32>
    %c0_5 = arith.constant 0 : index
    %c0_6 = arith.constant 0 : index
    %c0_7 = arith.constant 0 : index
    %6 = vector.load %arg4[%c0_5, %c0_6, %c0_7] : memref<2x32x32xf32, #tpu.memory_space<vmem>>, vector<1x32x32xf32>
    %7 = vector.shape_cast %6 : vector<1x32x32xf32> to vector<32x32xf32>
    %cst_8 = arith.constant dense<0.000000e+00> : vector<32x256xf32>
    %8 = tpu.matmul %7, %5, %cst_8 {dimension_numbers = #tpu.dot_dimension_numbers<[1], [0], [0], [1], [0, 0, 1, 1], [], []>} : vector<32x32xf32>, vector<32x256xf32>, vector<32x256xf32> -> vector<32x256xf32>
    %c0_9 = arith.constant 0 : index
    %c0_10 = arith.constant 0 : index
    %c0_11 = arith.constant 0 : index
    %9 = vector.load %arg5[%c0_9, %c0_10, %c0_11] : memref<2x32x1xf32, #tpu.memory_space<vmem>>, vector<1x32x1xf32>
    %10 = vector.shape_cast %9 : vector<1x32x1xf32> to vector<32x1xf32>
    %11 = vector.broadcast %10 : vector<32x1xf32> to vector<32x256xf32>
    %12 = arith.addf %8, %11 : vector<32x256xf32>
    %cst_12 = arith.constant 0.000000e+00 : f32
    %13 = vector.broadcast %cst_12 : f32 to vector<32x256xf32>
    %14 = arith.maximumf %12, %13 : vector<32x256xf32>
    %15 = arith.addf %14, %5 : vector<32x256xf32>
    %c1 = arith.constant 1 : index
    %c0_13 = arith.constant 0 : index
    %c0_14 = arith.constant 0 : index
    %16 = vector.load %arg4[%c1, %c0_13, %c0_14] : memref<2x32x32xf32, #tpu.memory_space<vmem>>, vector<1x32x32xf32>
    %17 = vector.shape_cast %16 : vector<1x32x32xf32> to vector<32x32xf32>
    %cst_15 = arith.constant dense<0.000000e+00> : vector<32x256xf32>
    %18 = tpu.matmul %17, %15, %cst_15 {dimension_numbers = #tpu.dot_dimension_numbers<[1], [0], [0], [1], [0, 0, 1, 1], [], []>} : vector<32x32xf32>, vector<32x256xf32>, vector<32x256xf32> -> vector<32x256xf32>
    %c1_16 = arith.constant 1 : index
    %c0_17 = arith.constant 0 : index
    %c0_18 = arith.constant 0 : index
    %19 = vector.load %arg5[%c1_16, %c0_17, %c0_18] : memref<2x32x1xf32, #tpu.memory_space<vmem>>, vector<1x32x1xf32>
    %20 = vector.shape_cast %19 : vector<1x32x1xf32> to vector<32x1xf32>
    %21 = vector.broadcast %20 : vector<32x1xf32> to vector<32x256xf32>
    %22 = arith.addf %18, %21 : vector<32x256xf32>
    %cst_19 = arith.constant 0.000000e+00 : f32
    %23 = vector.broadcast %cst_19 : f32 to vector<32x256xf32>
    %24 = arith.maximumf %22, %23 : vector<32x256xf32>
    %25 = arith.addf %24, %15 : vector<32x256xf32>
    %c0_20 = arith.constant 0 : index
    %c0_21 = arith.constant 0 : index
    %26 = vector.load %arg6[%c0_20, %c0_21] : memref<1x32xf32, #tpu.memory_space<vmem>>, vector<1x32xf32>
    %cst_22 = arith.constant dense<0.000000e+00> : vector<1x256xf32>
    %27 = tpu.matmul %26, %25, %cst_22 {dimension_numbers = #tpu.dot_dimension_numbers<[1], [0], [0], [1], [0, 0, 1, 1], [], []>} : vector<1x32xf32>, vector<32x256xf32>, vector<1x256xf32> -> vector<1x256xf32>
    %c0_23 = arith.constant 0 : index
    %c0_24 = arith.constant 0 : index
    %28 = vector.load %arg7[%c0_23, %c0_24] : memref<1x1xf32, #tpu.memory_space<vmem>>, vector<1x1xf32>
    %29 = vector.broadcast %28 : vector<1x1xf32> to vector<1x256xf32>
    %30 = arith.addf %27, %29 : vector<1x256xf32>
    %c0_25 = arith.constant 0 : index
    %c0_26 = arith.constant 0 : index
    %31 = memref.load %arg8[%c0_25, %c0_26] : memref<1x1xf32, #tpu.memory_space<smem>>
    %32 = vector.broadcast %31 : f32 to vector<1x256xf32>
    %33 = arith.mulf %30, %32 : vector<1x256xf32>
    %c0_27 = arith.constant 0 : index
    %c0_28 = arith.constant 0 : index
    %34 = vector.load %arg9[%c0_27, %c0_28] : memref<1x256xf32, #tpu.memory_space<vmem>>, vector<1x256xf32>
    tpu.vector_store %arg9[%c0_27, %c0_28], %33 {strides = array<i32>} : memref<1x256xf32, #tpu.memory_space<vmem>>, vector<1x256xf32>,
    return
  }
  func.func @transform_0(%arg0: i32) -> (i32, i32) {
    %c0_i32 = arith.constant 0 : i32
    %c0_i32_0 = arith.constant 0 : i32
    return %c0_i32, %arg0 : i32, i32
  }
  func.func @transform_1(%arg0: i32) -> (i32, i32) {
    %c0_i32 = arith.constant 0 : i32
    %c0_i32_0 = arith.constant 0 : i32
    %c0_i32_1 = arith.constant 0 : i32
    return %c0_i32, %c0_i32_0 : i32, i32
  }
  func.func @transform_2(%arg0: i32) -> (i32, i32) {
    %c0_i32 = arith.constant 0 : i32
    %c0_i32_0 = arith.constant 0 : i32
    %c0_i32_1 = arith.constant 0 : i32
    return %c0_i32, %c0_i32_0 : i32, i32
  }
  func.func @transform_3(%arg0: i32) -> (i32, i32, i32) {
    %c0_i32 = arith.constant 0 : i32
    %c0_i32_0 = arith.constant 0 : i32
    %c0_i32_1 = arith.constant 0 : i32
    %c0_i32_2 = arith.constant 0 : i32
    return %c0_i32, %c0_i32_0, %c0_i32_1 : i32, i32, i32
  }
  func.func @transform_4(%arg0: i32) -> (i32, i32, i32) {
    %c0_i32 = arith.constant 0 : i32
    %c0_i32_0 = arith.constant 0 : i32
    %c0_i32_1 = arith.constant 0 : i32
    %c0_i32_2 = arith.constant 0 : i32
    return %c0_i32, %c0_i32_0, %c0_i32_1 : i32, i32, i32
  }
  func.func @transform_5(%arg0: i32) -> (i32, i32) {
    %c0_i32 = arith.constant 0 : i32
    %c0_i32_0 = arith.constant 0 : i32
    %c0_i32_1 = arith.constant 0 : i32
    return %c0_i32, %c0_i32_0 : i32, i32
  }
  func.func @transform_6(%arg0: i32) -> (i32, i32) {
    %c0_i32 = arith.constant 0 : i32
    %c0_i32_0 = arith.constant 0 : i32
    %c0_i32_1 = arith.constant 0 : i32
    return %c0_i32, %c0_i32_0 : i32, i32
  }
  func.func @transform_7(%arg0: i32) -> (i32, i32) {
    %c0_i32 = arith.constant 0 : i32
    %c0_i32_0 = arith.constant 0 : i32
    %c0_i32_1 = arith.constant 0 : i32
    return %c0_i32, %c0_i32_0 : i32, i32
  }
  func.func @transform_8(%arg0: i32) -> (i32, i32) {
    %c0_i32 = arith.constant 0 : i32
    %c0_i32_0 = arith.constant 0 : i32
    return %c0_i32, %arg0 : i32, i32
  }
}

</mosaic_0001>

<llo_original>
// kernel: tpu_custom_call.1
$region0: #{tpu_custom_call.1}
  #allocation0 [shape = 'u32[]', space=smem, size = 0x4, offset = 0x4, fixed_abs, tag = 'smem constant byte address 0x4 - core index']
  #allocation1 [shape = 'u32[144,128]{1,0:T(1,128)}', space=vmem, size = 0x12000, scoped, tag = 'internal scratch']
  #allocation2 [shape = 'f32[1,1]{1,0:T(1,128)S(1)}', space=vmem, size = 0x200, scoped, tag = 'scoped memory for tpu_custom_call.1']
  #allocation3 [shape = 'f32[1,1]{1,0:T(1,128)S(6)}', space=smem, size = 0x200, scoped, tag = 'scoped memory for tpu_custom_call.1']
  %s0 = inlined_call_operand.vmem [shape: f32[16,512], index: 0, kind: input, shape index: {}]
  %s1 = inlined_call_operand.vmem [shape: f32[32,16], index: 1, kind: input, shape index: {}]
  %s2 = inlined_call_operand.vmem [shape: f32[32,1], index: 2, kind: input, shape index: {}]
  %s3 = inlined_call_operand.vmem [shape: f32[2,32,32], index: 3, kind: input, shape index: {}]
  %s4 = inlined_call_operand.vmem [shape: f32[2,32,1], index: 4, kind: input, shape index: {}]
  %s5 = inlined_call_operand.vmem [shape: f32[1,32], index: 5, kind: input, shape index: {}]
  %s6 = inlined_call_operand.<no memory space> [shape: f32[1,1], index: 6, kind: input, shape index: {}]
  %s7 = inlined_call_operand.<no memory space> [shape: f32[1,1], index: 7, kind: input, shape index: {}]
  %s8 = inlined_call_operand.hbm [shape: f32[1,512], index: 8, kind: output, shape index: {}]
  %s9 = sld [smem:[#allocation0]]
  $region88: #{tpu_custom_call.1} parent=0
    _
  %s11 = ssub.s32 1, %s9
  %s12 = scalar_select 0, %s11, %s9
  %v13 = vstv %s6
  %14 = vst [vmem:[#allocation2] sm:$0x1] %v13
  %15 = sst [smem:[#allocation3]] %s7
  $region1: #{tpu_custom_call.1} parent=0
    #allocation4 [shape = 'u8[32768]{0}', space=vmem, size = 0x8000, scoped, tag = 'input window, operand 0']
    #allocation5 [shape = 'u8[2048]{0}', space=vmem, size = 0x800, scoped, tag = 'output window, operand 0']
    #allocation6 [shape = 's32[2]{0}', space=sflag, size = 0x8, scoped, tag = 'scoped memory for tpu_custom_call.1']
    %16 = vsyncpa [#allocation6], 0
    %s17 = scalar_lea.sflag [#allocation6], 1
    %18 = vsyncpa %s17, 0
    loop: start=0, step=1, limit=4
    $region2: #{tpu_custom_call.1} parent=1 // loop_pre_header
      _
    $region3: #{tpu_custom_call.1} parent=1 // loop_header
      %s20 = sphi 0, %s24
      %p21 = scmp.ge.s32.totalorder %s20, 4
      %s30 = sphi 0, %s32
      %s33 = sphi 0, %s30
      %s34 = sphi 0, %s33
      %s50 = sphi 0, %s34
      %s54 = sphi 0, %s54
      %s56 = sphi 0, %s54
      %s57 = sphi 0, %s56
      %s71 = sphi 0, %s57
      %s75 = sphi 0, %s75
      %s77 = sphi 0, %s75
      %s78 = sphi 0, %s77
      %s92 = sphi 0, %s78
      %s96 = sphi 0, %s96
      %s98 = sphi 0, %s96
      %s99 = sphi 0, %s98
      %s113 = sphi 0, %s99
      %s117 = sphi 0, %s117
      %s119 = sphi 0, %s117
      %s120 = sphi 0, %s119
      %s134 = sphi 0, %s120
      %s138 = sphi 0, %s138
      %s140 = sphi 0, %s138
      %s141 = sphi 0, %s140
      %s155 = sphi 0, %s141
      %s159 = sphi 0, %s159
      %s161 = sphi 0, %s159
      %s162 = sphi 0, %s161
      %s176 = sphi 0, %s162
      %s180 = sphi 0, %s180
      %s182 = sphi 0, %s180
      %s183 = sphi 0, %s182
      %s197 = sphi 0, %s183
      %s203 = sphi 0, %s205
      %s206 = sphi 0, %s203
      %s207 = sphi 0, %s206
      %s223 = sphi 0, %s207
    $region4: #{tpu_custom_call.1} parent=1 // loop_header_branch
      %23 = sbr.rel (%p21) target = $region8
    $region5: #{tpu_custom_call.1} parent=1 // loop_body
      %s25 = ssub.s32 %s20, 1
      %s26 = ssub.s32 %s20, 2
      %s27 = sadd.s32 %s20, 1
      %s28 = ssub.s32 %s20, %s27
      %p29 = scmp.eq.s32.totalorder %s28, 0
      %s31 = sadd.s32 %s30, 1
      %s32 = scalar_select %p29, %s30, %s31
      %p35 = pneg %p29
      %p36 = scmp.eq.s32.totalorder %s20, 1
      %p37 = por %p35, %p36
      %p38 = scmp.ne.s32.totalorder %s30, %s33
      %p39 = scmp.eq.s32.totalorder %s20, 0
      %p40 = por %p38, %p39
      %p41 = scmp.ne.s32.totalorder %s30, %s33
      %p42 = scmp.eq.s32.totalorder %s25, 1
      %p43 = por %p41, %p42
      %p44 = scmp.ne.s32.totalorder %s33, %s34
      %p45 = scmp.eq.s32.totalorder %s25, 0
      %p46 = por %p44, %p45
      %p47 = scmp.ne.s32.totalorder %s33, %s34
      %p48 = scmp.eq.s32.totalorder %s26, 1
      %p49 = por %p47, %p48
      %p51 = scmp.ne.s32.totalorder %s34, %s50
      %p52 = scmp.eq.s32.totalorder %s26, 0
      %p53 = por %p51, %p52
      %s55 = sadd.s32 %s54, 1
      %p58 = scmp.eq.s32.totalorder %s20, 1
      %p59 = scmp.ne.s32.totalorder %s54, %s56
      %p60 = scmp.eq.s32.totalorder %s20, 0
      %p61 = por %p59, %p60
      %p62 = scmp.ne.s32.totalorder %s54, %s56
      %p63 = scmp.eq.s32.totalorder %s25, 1
      %p64 = por %p62, %p63
      %p65 = scmp.ne.s32.totalorder %s56, %s57
      %p66 = scmp.eq.s32.totalorder %s25, 0
      %p67 = por %p65, %p66
      %p68 = scmp.ne.s32.totalorder %s56, %s57
      %p69 = scmp.eq.s32.totalorder %s26, 1
      %p70 = por %p68, %p69
      %p72 = scmp.ne.s32.totalorder %s57, %s71
      %p73 = scmp.eq.s32.totalorder %s26, 0
      %p74 = por %p72, %p73
      %s76 = sadd.s32 %s75, 1
      %p79 = scmp.eq.s32.totalorder %s20, 1
      %p80 = scmp.ne.s32.totalorder %s75, %s77
      %p81 = scmp.eq.s32.totalorder %s20, 0
      %p82 = por %p80, %p81
      %p83 = scmp.ne.s32.totalorder %s75, %s77
      %p84 = scmp.eq.s32.totalorder %s25, 1
      %p85 = por %p83, %p84
      %p86 = scmp.ne.s32.totalorder %s77, %s78
      %p87 = scmp.eq.s32.totalorder %s25, 0
      %p88 = por %p86, %p87
      %p89 = scmp.ne.s32.totalorder %s77, %s78
      %p90 = scmp.eq.s32.totalorder %s26, 1
      %p91 = por %p89, %p90
      %p93 = scmp.ne.s32.totalorder %s78, %s92
      %p94 = scmp.eq.s32.totalorder %s26, 0
      %p95 = por %p93, %p94
      %s97 = sadd.s32 %s96, 1
      %p100 = scmp.eq.s32.totalorder %s20, 1
      %p101 = scmp.ne.s32.totalorder %s96, %s98
      %p102 = scmp.eq.s32.totalorder %s20, 0
      %p103 = por %p101, %p102
      %p104 = scmp.ne.s32.totalorder %s96, %s98
      %p105 = scmp.eq.s32.totalorder %s25, 1
      %p106 = por %p104, %p105
      %p107 = scmp.ne.s32.totalorder %s98, %s99
      %p108 = scmp.eq.s32.totalorder %s25, 0
      %p109 = por %p107, %p108
      %p110 = scmp.ne.s32.totalorder %s98, %s99
      %p111 = scmp.eq.s32.totalorder %s26, 1
      %p112 = por %p110, %p111
      %p114 = scmp.ne.s32.totalorder %s99, %s113
      %p115 = scmp.eq.s32.totalorder %s26, 0
      %p116 = por %p114, %p115
      %s118 = sadd.s32 %s117, 1
      %p121 = scmp.eq.s32.totalorder %s20, 1
      %p122 = scmp.ne.s32.totalorder %s117, %s119
      %p123 = scmp.eq.s32.totalorder %s20, 0
      %p124 = por %p122, %p123
      %p125 = scmp.ne.s32.totalorder %s117, %s119
      %p126 = scmp.eq.s32.totalorder %s25, 1
      %p127 = por %p125, %p126
      %p128 = scmp.ne.s32.totalorder %s119, %s120
      %p129 = scmp.eq.s32.totalorder %s25, 0
      %p130 = por %p128, %p129
      %p131 = scmp.ne.s32.totalorder %s119, %s120
      %p132 = scmp.eq.s32.totalorder %s26, 1
      %p133 = por %p131, %p132
      %p135 = scmp.ne.s32.totalorder %s120, %s134
      %p136 = scmp.eq.s32.totalorder %s26, 0
      %p137 = por %p135, %p136
      %s139 = sadd.s32 %s138, 1
      %p142 = scmp.eq.s32.totalorder %s20, 1
      %p143 = scmp.ne.s32.totalorder %s138, %s140
      %p144 = scmp.eq.s32.totalorder %s20, 0
      %p145 = por %p143, %p144
      %p146 = scmp.ne.s32.totalorder %s138, %s140
      %p147 = scmp.eq.s32.totalorder %s25, 1
      %p148 = por %p146, %p147
      %p149 = scmp.ne.s32.totalorder %s140, %s141
      %p150 = scmp.eq.s32.totalorder %s25, 0
      %p151 = por %p149, %p150
      %p152 = scmp.ne.s32.totalorder %s140, %s141
      %p153 = scmp.eq.s32.totalorder %s26, 1
      %p154 = por %p152, %p153
      %p156 = scmp.ne.s32.totalorder %s141, %s155
      %p157 = scmp.eq.s32.totalorder %s26, 0
      %p158 = por %p156, %p157
      %s160 = sadd.s32 %s159, 1
      %p163 = scmp.eq.s32.totalorder %s20, 1
      %p164 = scmp.ne.s32.totalorder %s159, %s161
      %p165 = scmp.eq.s32.totalorder %s20, 0
      %p166 = por %p164, %p165
      %p167 = scmp.ne.s32.totalorder %s159, %s161
      %p168 = scmp.eq.s32.totalorder %s25, 1
      %p169 = por %p167, %p168
      %p170 = scmp.ne.s32.totalorder %s161, %s162
      %p171 = scmp.eq.s32.totalorder %s25, 0
      %p172 = por %p170, %p171
      %p173 = scmp.ne.s32.totalorder %s161, %s162
      %p174 = scmp.eq.s32.totalorder %s26, 1
      %p175 = por %p173, %p174
      %p177 = scmp.ne.s32.totalorder %s162, %s176
      %p178 = scmp.eq.s32.totalorder %s26, 0
      %p179 = por %p177, %p178
      %s181 = sadd.s32 %s180, 1
      %p184 = scmp.eq.s32.totalorder %s20, 1
      %p185 = scmp.ne.s32.totalorder %s180, %s182
      %p186 = scmp.eq.s32.totalorder %s20, 0
      %p187 = por %p185, %p186
      %p188 = scmp.ne.s32.totalorder %s180, %s182
      %p189 = scmp.eq.s32.totalorder %s25, 1
      %p190 = por %p188, %p189
      %p191 = scmp.ne.s32.totalorder %s182, %s183
      %p192 = scmp.eq.s32.totalorder %s25, 0
      %p193 = por %p191, %p192
      %p194 = scmp.ne.s32.totalorder %s182, %s183
      %p195 = scmp.eq.s32.totalorder %s26, 1
      %p196 = por %p194, %p195
      %p198 = scmp.ne.s32.totalorder %s183, %s197
      %p199 = scmp.eq.s32.totalorder %s26, 0
      %p200 = por %p198, %p199
      %s201 = ssub.s32 %s20, %s27
      %p202 = scmp.eq.s32.totalorder %s201, 0
      %s204 = sadd.s32 %s203, 1
      %s205 = scalar_select %p202, %s203, %s204
      %p208 = pneg %p202
      %p209 = scmp.eq.s32.totalorder %s20, 1
      %p210 = por %p208, %p209
      %p211 = scmp.ne.s32.totalorder %s203, %s206
      %p212 = scmp.eq.s32.totalorder %s20, 0
      %p213 = por %p211, %p212
      %p214 = scmp.ne.s32.totalorder %s203, %s206
      %p215 = scmp.eq.s32.totalorder %s25, 1
      %p216 = por %p214, %p215
      %p217 = scmp.ne.s32.totalorder %s206, %s207
      %p218 = scmp.eq.s32.totalorder %s25, 0
      %p219 = por %p217, %p218
      %p220 = scmp.ne.s32.totalorder %s206, %s207
      %p221 = scmp.eq.s32.totalorder %s26, 1
      %p222 = por %p220, %p221
      %p224 = scmp.ne.s32.totalorder %s207, %s223
      %p225 = scmp.eq.s32.totalorder %s26, 0
      %p226 = por %p224, %p225
      %p227 = scmp.le.s32.totalorder 1, %s20
      %p228 = scmp.lt.s32.totalorder %s20, 3
      %p229 = pnand %p227, %p228
      %p230 = pneg %p229
      // Predicated region
      $region9: #{tpu_custom_call.1} parent=5 // pred_check
        _
      $region10: #{tpu_custom_call.1} parent=5 // pred_check_branch
        %232 = sbr.rel (%p229) target = $region12
      $region11: #{tpu_custom_call.1} parent=5 // pred_region
        %s233 = ssub.s32 %s20, 1
        // Predicated region
        $region13: #{tpu_custom_call.1} parent=11 // pred_check
          %p234 = pneg %p67
        $region14: #{tpu_custom_call.1} parent=11 // pred_check_branch
          %236 = sbr.rel (%p234) target = $region16
        $region15: #{tpu_custom_call.1} parent=11 // pred_region
          _
        $region16: #{tpu_custom_call.1} parent=11 // pred_fallthru
          _
        // Predicated region
        $region17: #{tpu_custom_call.1} parent=11 // pred_check
          %p237 = pneg %p88
        $region18: #{tpu_custom_call.1} parent=11 // pred_check_branch
          %239 = sbr.rel (%p237) target = $region20
        $region19: #{tpu_custom_call.1} parent=11 // pred_region
          _
        $region20: #{tpu_custom_call.1} parent=11 // pred_fallthru
          _
        // Predicated region
        $region21: #{tpu_custom_call.1} parent=11 // pred_check
          %p240 = pneg %p109
        $region22: #{tpu_custom_call.1} parent=11 // pred_check_branch
          %242 = sbr.rel (%p240) target = $region24
        $region23: #{tpu_custom_call.1} parent=11 // pred_region
          _
        $region24: #{tpu_custom_call.1} parent=11 // pred_fallthru
          _
        // Predicated region
        $region25: #{tpu_custom_call.1} parent=11 // pred_check
          %p243 = pneg %p130
        $region26: #{tpu_custom_call.1} parent=11 // pred_check_branch
          %245 = sbr.rel (%p243) target = $region28
        $region27: #{tpu_custom_call.1} parent=11 // pred_region
          _
        $region28: #{tpu_custom_call.1} parent=11 // pred_fallthru
          _
        // Predicated region
        $region29: #{tpu_custom_call.1} parent=11 // pred_check
          %p246 = pneg %p151
        $region30: #{tpu_custom_call.1} parent=11 // pred_check_branch
          %248 = sbr.rel (%p246) target = $region32
        $region31: #{tpu_custom_call.1} parent=11 // pred_region
          _
        $region32: #{tpu_custom_call.1} parent=11 // pred_fallthru
          _
        // Predicated region
        $region33: #{tpu_custom_call.1} parent=11 // pred_check
          %p249 = pneg %p172
        $region34: #{tpu_custom_call.1} parent=11 // pred_check_branch
          %251 = sbr.rel (%p249) target = $region36
        $region35: #{tpu_custom_call.1} parent=11 // pred_region
          _
        $region36: #{tpu_custom_call.1} parent=11 // pred_fallthru
          _
        // Predicated region
        $region37: #{tpu_custom_call.1} parent=11 // pred_check
          %p252 = pneg %p193
        $region38: #{tpu_custom_call.1} parent=11 // pred_check_branch
          %254 = sbr.rel (%p252) target = $region40
        $region39: #{tpu_custom_call.1} parent=11 // pred_region
          _
        $region40: #{tpu_custom_call.1} parent=11 // pred_fallthru
          _
      $region12: #{tpu_custom_call.1} parent=5 // pred_fallthru
        _
      %p255 = scmp.lt.s32.totalorder %s20, 2
      // Predicated region
      $region41: #{tpu_custom_call.1} parent=5 // pred_check
        %p256 = pneg %p255
      $region42: #{tpu_custom_call.1} parent=5 // pred_check_branch
        %258 = sbr.rel (%p256) target = $region44
      $region43: #{tpu_custom_call.1} parent=5 // pred_region
        // Predicated region
        $region45: #{tpu_custom_call.1} parent=43 // pred_check
          %p259 = pneg %p40
        $region46: #{tpu_custom_call.1} parent=43 // pred_check_branch
          %261 = sbr.rel (%p259) target = $region48
        $region47: #{tpu_custom_call.1} parent=43 // pred_region
          %s262 = sand.u32 %s30, 1
          %s263 = sand.u32 %s30, 1
          %s264 = smul.addr %s263, 32
          %s265 = scalar_lea.vmem [#allocation4], %s264
          %s266 = smul.u32 2, %s20
          %s267 = smul.addr %s266, 8
          %s268 = scalar_lea.vmem %s0, %s267
          // Predicated region
          $region49: #{tpu_custom_call.1} parent=47 // pred_check
            _
          $region50: #{tpu_custom_call.1} parent=47 // pred_check_branch
            %270 = sbr.rel (0) target = $region52
          $region51: #{tpu_custom_call.1} parent=47 // pred_region
            // Predicated region
            $region53: #{tpu_custom_call.1} parent=51 // pred_check
              _
            $region54: #{tpu_custom_call.1} parent=51 // pred_check_branch
              %272 = sbr.rel (0) target = $region56
            $region55: #{tpu_custom_call.1} parent=51 // pred_region
              loop: start=0, step=1, limit=1
              $region57: #{tpu_custom_call.1} parent=55 // loop_pre_header
                _
              $region58: #{tpu_custom_call.1} parent=55 // loop_header
                %s274 = sphi 0, %s278
                %p275 = scmp.ge.s32.totalorder %s274, 1
                %s279 = sphi %s268, %s268
                %s280 = sphi %s265, %s265
              $region59: #{tpu_custom_call.1} parent=55 // loop_header_branch
                %277 = sbr.rel (%p275) target = $region63
              $region60: #{tpu_custom_call.1} parent=55 // loop_body
                %v281 = vld [vmem:[%s279] sm:$0xff]
                %282 = vst [vmem:[%s280] sm:$0xff] %v281
                %v283 = vld [vmem:[%s279 + $0x8] sm:$0xff]
                %284 = vst [vmem:[%s280 + $0x8] sm:$0xff] %v283
                %v285 = vld [vmem:[%s279 + $0x20] sm:$0xff]
                %286 = vst [vmem:[%s280 + $0x10] sm:$0xff] %v285
                %v287 = vld [vmem:[%s279 + $0x28] sm:$0xff]
                %288 = vst [vmem:[%s280 + $0x18] sm:$0xff] %v287
              $region61: #{tpu_custom_call.1} parent=55 // loop_footer
                %s278 = sadd.s32 1, %s274
              $region62: #{tpu_custom_call.1} parent=55 // loop_footer_branch
                %273 = sbr.rel target = $region58
              $region63: #{tpu_custom_call.1} parent=55 // loop_exit
                _
            $region56: #{tpu_custom_call.1} parent=51 // pred_fallthru
              _
            // Predicated region
            $region64: #{tpu_custom_call.1} parent=51 // pred_check
              _
            $region65: #{tpu_custom_call.1} parent=51 // pred_check_branch
              %290 = sbr.rel target = $region67
            $region66: #{tpu_custom_call.1} parent=51 // pred_region
              _
            $region67: #{tpu_custom_call.1} parent=51 // pred_fallthru
              _
          $region52: #{tpu_custom_call.1} parent=47 // pred_fallthru
            _
          %291 = vnop
        $region48: #{tpu_custom_call.1} parent=43 // pred_fallthru
          _
      $region44: #{tpu_custom_call.1} parent=5 // pred_fallthru
        _
      %p292 = scmp.le.s32.totalorder 1, %s20
      %p293 = scmp.lt.s32.totalorder %s20, 3
      %p294 = pnand %p292, %p293
      %p295 = pneg %p294
      // Predicated region
      $region68: #{tpu_custom_call.1} parent=5 // pred_check
        _
      $region69: #{tpu_custom_call.1} parent=5 // pred_check_branch
        %297 = sbr.rel (%p294) target = $region71
      $region70: #{tpu_custom_call.1} parent=5 // pred_region
        %s298 = ssub.s32 %s20, 1
        %s299 = sand.u32 %s33, 1
        %s300 = sand.u32 %s33, 1
        %s301 = smul.addr %s300, 32
        %s302 = scalar_lea.vmem [#allocation4], %s301
        // Predicated region
        $region72: #{tpu_custom_call.1} parent=70 // pred_check
          %p303 = pneg %p46
        $region73: #{tpu_custom_call.1} parent=70 // pred_check_branch
          %305 = sbr.rel (%p303) target = $region75
        $region74: #{tpu_custom_call.1} parent=70 // pred_region
          _
        $region75: #{tpu_custom_call.1} parent=70 // pred_fallthru
          _
        %s306 = sand.u32 %s33, 1
        %s307 = sand.u32 %s33, 1
        %s308 = smul.addr %s307, 32
        %s309 = scalar_lea.vmem [#allocation4], %s308
        %p310 = pneg %p46
        %p311 = pneg %p43
        %p312 = pneg %p67
        %p313 = pneg %p64
        %p314 = pneg %p88
        %p315 = pneg %p85
        %p316 = pneg %p109
        %p317 = pneg %p106
        %p318 = pneg %p130
        %p319 = pneg %p127
        %p320 = pneg %p151
        %p321 = pneg %p148
        %p322 = pneg %p172
        %p323 = pneg %p169
        %p324 = pneg %p193
        %p325 = pneg %p190
        %p326 = pneg %p219
        %p327 = pneg %p216
        %s328 = sand.u32 %s206, 1
        %s329 = scalar_lea.sflag [#allocation6], %s328
        %s330 = sand.u32 %s206, 1
        %s331 = smul.addr %s330, 2
        %s332 = scalar_lea.vmem [#allocation5], %s331
        %s333 = smul.u32 2, %s25
        %s334 = smul.u32 2, %s25
        %v335 = vld [vmem:[%s1] sm:$0xff]
        %v336 = vld [vmem:[%s1 + $0x8] sm:$0xff]
        %v337 = vld [vmem:[%s1 + $0x10] sm:$0xff]
        %v338 = vld [vmem:[%s1 + $0x18] sm:$0xff]
        %v339 = vld [vmem:[%s302] sm:$0xff]
        %v340 = vld [vmem:[%s302 + $0x8] sm:$0xff]
        %v341 = vld [vmem:[%s302 + $0x10] sm:$0xff]
        %v342 = vld [vmem:[%s302 + $0x18] sm:$0xff]
        %v343 = vld [vmem:[%s2] sm:$0xff]
        %v344 = vld [vmem:[%s2 + $0x8] sm:$0xff]
        %v345 = vld [vmem:[%s2 + $0x10] sm:$0xff]
        %v346 = vld [vmem:[%s2 + $0x18] sm:$0xff]
        %348 = vset.pattern.permute.xlu0 0
        %349 = vperm.xlu0 %348, %v343
        %v350 = vpop.permute.xlu0 %349
        %353 = vset.pattern.permute.xlu0 0
        %354 = vperm.xlu0 %353, %v344
        %v355 = vpop.permute.xlu0 %354
        %358 = vset.pattern.permute.xlu0 0
        %359 = vperm.xlu0 %358, %v345
        %v360 = vpop.permute.xlu0 %359
        %363 = vset.pattern.permute.xlu0 0
        %364 = vperm.xlu0 %363, %v346
        %v365 = vpop.permute.xlu0 %364
        %vm367 = vcmask 130048
        %v369 = vsel %vm367, %v335, 0
        %v372 = vsel %vm367, %v336, 0
        %v375 = vsel %vm367, %v337, 0
        %v378 = vsel %vm367, %v338, 0
        %380 = vmatprep.subr.mxu0 %v340
        %381 = vmatpush1.msra.mxu0 %v339
        %382 = vmatprep.subr.mxu0 %v342
        %383 = vmatpush1.msra.mxu0 %v341
        %384 = vmatprep.subr.mxu0 0.0
        %385 = vmatpush1.msra.mxu0 0.0
        %386 = vmatprep.subr.mxu0 0.0
        %387 = vmatpush1.msra.mxu0 0.0
        %388 = vmatprep.subr.mxu0 0.0
        %389 = vmatpush1.msra.mxu0 0.0
        %390 = vmatprep.subr.mxu0 0.0
        %391 = vmatpush1.msra.mxu0 0.0
        %392 = vmatprep.subr.mxu0 0.0
        %393 = vmatpush1.msra.mxu0 0.0
        %394 = vmatprep.subr.mxu0 0.0
        %395 = vmatpush1.msra.mxu0 0.0
        %396 = vmatprep.subr.mxu0 0.0
        %397 = vmatpush1.msra.mxu0 0.0
        %398 = vmatprep.subr.mxu0 0.0
        %399 = vmatpush1.msra.mxu0 0.0
        %400 = vmatprep.subr.mxu0 0.0
        %401 = vmatpush1.msra.mxu0 0.0
        %402 = vmatprep.subr.mxu0 0.0
        %403 = vmatpush1.msra.mxu0 0.0
        %404 = vmatprep.subr.mxu0 0.0
        %405 = vmatpush1.msra.mxu0 0.0
        %406 = vmatprep.subr.mxu0 0.0
        %407 = vmatpush1.msra.mxu0 0.0
        %408 = vmatprep.subr.mxu0 0.0
        %409 = vmatpush1.msra.mxu0 0.0
        %410 = vmatprep.subr.mxu0 0.0
        %411 = vmatpush1.msra.mxu0 0.0
        %412 = vmatprep.subr.mxu0 0.0
        %413 = vmatpush1.msra.mxu0 0.0
        %414 = vmatprep.subr.mxu0 0.0
        %415 = vmatpush1.msra.mxu0 0.0
        %416 = vmatprep.subr.mxu0 0.0
        %417 = vmatpush1.msra.mxu0 0.0
        %418 = vmatprep.subr.mxu0 0.0
        %419 = vmatpush1.msra.mxu0 0.0
        %420 = vmatprep.subr.mxu0 0.0
        %421 = vmatpush1.msra.mxu0 0.0
        %422 = vmatprep.subr.mxu0 0.0
        %423 = vmatpush1.msra.mxu0 0.0
        %424 = vmatprep.subr.mxu0 0.0
        %425 = vmatpush1.msra.mxu0 0.0
        %426 = vmatprep.subr.mxu0 0.0
        %427 = vmatpush1.msra.mxu0 0.0
        %428 = vmatprep.subr.mxu0 0.0
        %429 = vmatpush1.msra.mxu0 0.0
        %430 = vmatprep.subr.mxu0 0.0
        %431 = vmatpush1.msra.mxu0 0.0
        %432 = vmatprep.subr.mxu0 0.0
        %433 = vmatpush1.msra.mxu0 0.0
        %434 = vmatprep.subr.mxu0 0.0
        %435 = vmatpush1.msra.mxu0 0.0
        %436 = vmatprep.subr.mxu0 0.0
        %437 = vmatpush1.msra.mxu0 0.0
        %438 = vmatprep.subr.mxu0 0.0
        %439 = vmatpush1.msra.mxu0 0.0
        %440 = vmatprep.subr.mxu0 0.0
        %441 = vmatpush1.msra.mxu0 0.0
        %442 = vmatprep.subr.mxu0 0.0
        %443 = vmatpush1.msra.mxu0 0.0
        %444 = vmatprep.mubr.f32.mxu0 0.0
        %445 = vmatmul.mubr.f32.gmra.mrb[0].mxu0 %v369
        %v446 = vpop.f32.mrb[0].mxu0
        %v447 = vadd.f32 %v350, %v446
        %v448 = vpop.f32.mrb[0].mxu0
        %v449 = vadd.f32 %v350, %v448
        %450 = vmatprep.mubr.f32.mxu0 0.0
        %451 = vmatmul.mubr.f32.gmra.mrb[0].mxu0 %v372
        %v452 = vpop.f32.mrb[0].mxu0
        %v453 = vadd.f32 %v355, %v452
        %v454 = vpop.f32.mrb[0].mxu0
        %v455 = vadd.f32 %v355, %v454
        %456 = vmatprep.mubr.f32.mxu0 0.0
        %457 = vmatmul.mubr.f32.gmra.mrb[0].mxu0 %v375
        %v458 = vpop.f32.mrb[0].mxu0
        %v459 = vadd.f32 %v360, %v458
        %v460 = vpop.f32.mrb[0].mxu0
        %v461 = vadd.f32 %v360, %v460
        %462 = vmatprep.mubr.f32.mxu0 0.0
        %463 = vmatmul.mubr.f32.gmra.mrb[0].mxu0 %v378
        %v464 = vpop.f32.mrb[0].mxu0
        %v465 = vadd.f32 %v365, %v464
        %v466 = vpop.f32.mrb[0].mxu0
        %v467 = vadd.f32 %v365, %v466
        %468 = vdwg.mxu0
        %v469 = vld [vmem:[%s3] sm:$0xff]
        %v470 = vld [vmem:[%s3 + $0x8] sm:$0xff]
        %v471 = vld [vmem:[%s3 + $0x10] sm:$0xff]
        %v472 = vld [vmem:[%s3 + $0x18] sm:$0xff]
        %v473 = vld [vmem:[%s4] sm:$0xff]
        %v474 = vld [vmem:[%s4 + $0x8] sm:$0xff]
        %v475 = vld [vmem:[%s4 + $0x10] sm:$0xff]
        %v476 = vld [vmem:[%s4 + $0x18] sm:$0xff]
        %478 = vset.pattern.permute.xlu0 0
        %479 = vperm.xlu0 %478, %v473
        %v480 = vpop.permute.xlu0 %479
        %483 = vset.pattern.permute.xlu0 0
        %484 = vperm.xlu0 %483, %v474
        %v485 = vpop.permute.xlu0 %484
        %488 = vset.pattern.permute.xlu0 0
        %489 = vperm.xlu0 %488, %v475
        %v490 = vpop.permute.xlu0 %489
        %493 = vset.pattern.permute.xlu0 0
        %494 = vperm.xlu0 %493, %v476
        %v495 = vpop.permute.xlu0 %494
        %vm497 = vcmask 261120
        %v499 = vsel %vm497, %v469, 0
        %v502 = vsel %vm497, %v470, 0
        %v505 = vsel %vm497, %v471, 0
        %v508 = vsel %vm497, %v472, 0
        %510 = vmatprep.subr.mxu0 %v449
        %511 = vmatpush1.msra.mxu0 %v447
        %512 = vmatprep.subr.mxu0 %v455
        %513 = vmatpush1.msra.mxu0 %v453
        %514 = vmatprep.subr.mxu0 %v461
        %515 = vmatpush1.msra.mxu0 %v459
        %516 = vmatprep.subr.mxu0 %v467
        %517 = vmatpush1.msra.mxu0 %v465
        %518 = vmatprep.subr.mxu0 0.0
        %519 = vmatpush1.msra.mxu0 0.0
        %520 = vmatprep.subr.mxu0 0.0
        %521 = vmatpush1.msra.mxu0 0.0
        %522 = vmatprep.subr.mxu0 0.0
        %523 = vmatpush1.msra.mxu0 0.0
        %524 = vmatprep.subr.mxu0 0.0
        %525 = vmatpush1.msra.mxu0 0.0
        %526 = vmatprep.subr.mxu0 0.0
        %527 = vmatpush1.msra.mxu0 0.0
        %528 = vmatprep.subr.mxu0 0.0
        %529 = vmatpush1.msra.mxu0 0.0
        %530 = vmatprep.subr.mxu0 0.0
        %531 = vmatpush1.msra.mxu0 0.0
        %532 = vmatprep.subr.mxu0 0.0
        %533 = vmatpush1.msra.mxu0 0.0
        %534 = vmatprep.subr.mxu0 0.0
        %535 = vmatpush1.msra.mxu0 0.0
        %536 = vmatprep.subr.mxu0 0.0
        %537 = vmatpush1.msra.mxu0 0.0
        %538 = vmatprep.subr.mxu0 0.0
        %539 = vmatpush1.msra.mxu0 0.0
        %540 = vmatprep.subr.mxu0 0.0
        %541 = vmatpush1.msra.mxu0 0.0
        %542 = vmatprep.subr.mxu0 0.0
        %543 = vmatpush1.msra.mxu0 0.0
        %544 = vmatprep.subr.mxu0 0.0
        %545 = vmatpush1.msra.mxu0 0.0
        %546 = vmatprep.subr.mxu0 0.0
        %547 = vmatpush1.msra.mxu0 0.0
        %548 = vmatprep.subr.mxu0 0.0
        %549 = vmatpush1.msra.mxu0 0.0
        %550 = vmatprep.subr.mxu0 0.0
        %551 = vmatpush1.msra.mxu0 0.0
        %552 = vmatprep.subr.mxu0 0.0
        %553 = vmatpush1.msra.mxu0 0.0
        %554 = vmatprep.subr.mxu0 0.0
        %555 = vmatpush1.msra.mxu0 0.0
        %556 = vmatprep.subr.mxu0 0.0
        %557 = vmatpush1.msra.mxu0 0.0
        %558 = vmatprep.subr.mxu0 0.0
        %559 = vmatpush1.msra.mxu0 0.0
        %560 = vmatprep.subr.mxu0 0.0
        %561 = vmatpush1.msra.mxu0 0.0
        %562 = vmatprep.subr.mxu0 0.0
        %563 = vmatpush1.msra.mxu0 0.0
        %564 = vmatprep.subr.mxu0 0.0
        %565 = vmatpush1.msra.mxu0 0.0
        %566 = vmatprep.subr.mxu0 0.0
        %567 = vmatpush1.msra.mxu0 0.0
        %568 = vmatprep.subr.mxu0 0.0
        %569 = vmatpush1.msra.mxu0 0.0
        %570 = vmatprep.subr.mxu0 0.0
        %571 = vmatpush1.msra.mxu0 0.0
        %572 = vmatprep.subr.mxu0 0.0
        %573 = vmatpush1.msra.mxu0 0.0
        %574 = vmatprep.mubr.f32.mxu0 0.0
        %575 = vmatmul.mubr.f32.gmra.mrb[0].mxu0 %v499
        %v576 = vpop.f32.mrb[0].mxu0
        %v577 = vadd.f32 %v480, %v576
        %v578 = vpop.f32.mrb[0].mxu0
        %v579 = vadd.f32 %v480, %v578
        %580 = vmatprep.mubr.f32.mxu0 0.0
        %581 = vmatmul.mubr.f32.gmra.mrb[0].mxu0 %v502
        %v582 = vpop.f32.mrb[0].mxu0
        %v583 = vadd.f32 %v485, %v582
        %v584 = vpop.f32.mrb[0].mxu0
        %v585 = vadd.f32 %v485, %v584
        %586 = vmatprep.mubr.f32.mxu0 0.0
        %587 = vmatmul.mubr.f32.gmra.mrb[0].mxu0 %v505
        %v588 = vpop.f32.mrb[0].mxu0
        %v589 = vadd.f32 %v490, %v588
        %v590 = vpop.f32.mrb[0].mxu0
        %v591 = vadd.f32 %v490, %v590
        %592 = vmatprep.mubr.f32.mxu0 0.0
        %593 = vmatmul.mubr.f32.gmra.mrb[0].mxu0 %v508
        %v594 = vpop.f32.mrb[0].mxu0
        %v595 = vadd.f32 %v495, %v594
        %v596 = vpop.f32.mrb[0].mxu0
        %v597 = vadd.f32 %v495, %v596
        %598 = vdwg.mxu0
        %v599 = vmax.f32 %v577, 0.0
        %v600 = vmax.f32 %v579, 0.0
        %v601 = vmax.f32 %v583, 0.0
        %v602 = vmax.f32 %v585, 0.0
        %v603 = vmax.f32 %v589, 0.0
        %v604 = vmax.f32 %v591, 0.0
        %v605 = vmax.f32 %v595, 0.0
        %v606 = vmax.f32 %v597, 0.0
        %v607 = vadd.f32 %v599, %v447
        %v608 = vadd.f32 %v600, %v449
        %v609 = vadd.f32 %v601, %v453
        %v610 = vadd.f32 %v602, %v455
        %v611 = vadd.f32 %v603, %v459
        %v612 = vadd.f32 %v604, %v461
        %v613 = vadd.f32 %v605, %v465
        %v614 = vadd.f32 %v606, %v467
        %s615 = scalar_lea.vmem %s3, 32
        %v616 = vld [vmem:[%s615] sm:$0xff]
        %v617 = vld [vmem:[%s615 + $0x8] sm:$0xff]
        %v618 = vld [vmem:[%s615 + $0x10] sm:$0xff]
        %v619 = vld [vmem:[%s615 + $0x18] sm:$0xff]
        %s620 = scalar_lea.vmem %s4, 32
        %v621 = vld [vmem:[%s620] sm:$0xff]
        %v622 = vld [vmem:[%s620 + $0x8] sm:$0xff]
        %v623 = vld [vmem:[%s620 + $0x10] sm:$0xff]
        %v624 = vld [vmem:[%s620 + $0x18] sm:$0xff]
        %626 = vset.pattern.permute.xlu0 0
        %627 = vperm.xlu0 %626, %v621
        %v628 = vpop.permute.xlu0 %627
        %631 = vset.pattern.permute.xlu0 0
        %632 = vperm.xlu0 %631, %v622
        %v633 = vpop.permute.xlu0 %632
        %636 = vset.pattern.permute.xlu0 0
        %637 = vperm.xlu0 %636, %v623
        %v638 = vpop.permute.xlu0 %637
        %641 = vset.pattern.permute.xlu0 0
        %642 = vperm.xlu0 %641, %v624
        %v643 = vpop.permute.xlu0 %642
        %v646 = vsel %vm497, %v616, 0
        %v649 = vsel %vm497, %v617, 0
        %v652 = vsel %vm497, %v618, 0
        %v655 = vsel %vm497, %v619, 0
        %657 = vmatprep.subr.mxu0 %v608
        %658 = vmatpush1.msra.mxu0 %v607
        %659 = vmatprep.subr.mxu0 %v610
        %660 = vmatpush1.msra.mxu0 %v609
        %661 = vmatprep.subr.mxu0 %v612
        %662 = vmatpush1.msra.mxu0 %v611
        %663 = vmatprep.subr.mxu0 %v614
        %664 = vmatpush1.msra.mxu0 %v613
        %665 = vmatprep.subr.mxu0 0.0
        %666 = vmatpush1.msra.mxu0 0.0
        %667 = vmatprep.subr.mxu0 0.0
        %668 = vmatpush1.msra.mxu0 0.0
        %669 = vmatprep.subr.mxu0 0.0
        %670 = vmatpush1.msra.mxu0 0.0
        %671 = vmatprep.subr.mxu0 0.0
        %672 = vmatpush1.msra.mxu0 0.0
        %673 = vmatprep.subr.mxu0 0.0
        %674 = vmatpush1.msra.mxu0 0.0
        %675 = vmatprep.subr.mxu0 0.0
        %676 = vmatpush1.msra.mxu0 0.0
        %677 = vmatprep.subr.mxu0 0.0
        %678 = vmatpush1.msra.mxu0 0.0
        %679 = vmatprep.subr.mxu0 0.0
        %680 = vmatpush1.msra.mxu0 0.0
        %681 = vmatprep.subr.mxu0 0.0
        %682 = vmatpush1.msra.mxu0 0.0
        %683 = vmatprep.subr.mxu0 0.0
        %684 = vmatpush1.msra.mxu0 0.0
        %685 = vmatprep.subr.mxu0 0.0
        %686 = vmatpush1.msra.mxu0 0.0
        %687 = vmatprep.subr.mxu0 0.0
        %688 = vmatpush1.msra.mxu0 0.0
        %689 = vmatprep.subr.mxu0 0.0
        %690 = vmatpush1.msra.mxu0 0.0
        %691 = vmatprep.subr.mxu0 0.0
        %692 = vmatpush1.msra.mxu0 0.0
        %693 = vmatprep.subr.mxu0 0.0
        %694 = vmatpush1.msra.mxu0 0.0
        %695 = vmatprep.subr.mxu0 0.0
        %696 = vmatpush1.msra.mxu0 0.0
        %697 = vmatprep.subr.mxu0 0.0
        %698 = vmatpush1.msra.mxu0 0.0
        %699 = vmatprep.subr.mxu0 0.0
        %700 = vmatpush1.msra.mxu0 0.0
        %701 = vmatprep.subr.mxu0 0.0
        %702 = vmatpush1.msra.mxu0 0.0
        %703 = vmatprep.subr.mxu0 0.0
        %704 = vmatpush1.msra.mxu0 0.0
        %705 = vmatprep.subr.mxu0 0.0
        %706 = vmatpush1.msra.mxu0 0.0
        %707 = vmatprep.subr.mxu0 0.0
        %708 = vmatpush1.msra.mxu0 0.0
        %709 = vmatprep.subr.mxu0 0.0
        %710 = vmatpush1.msra.mxu0 0.0
        %711 = vmatprep.subr.mxu0 0.0
        %712 = vmatpush1.msra.mxu0 0.0
        %713 = vmatprep.subr.mxu0 0.0
        %714 = vmatpush1.msra.mxu0 0.0
        %715 = vmatprep.subr.mxu0 0.0
        %716 = vmatpush1.msra.mxu0 0.0
        %717 = vmatprep.subr.mxu0 0.0
        %718 = vmatpush1.msra.mxu0 0.0
        %719 = vmatprep.subr.mxu0 0.0
        %720 = vmatpush1.msra.mxu0 0.0
        %721 = vmatprep.mubr.f32.mxu0 0.0
        %722 = vmatmul.mubr.f32.gmra.mrb[0].mxu0 %v646
        %v723 = vpop.f32.mrb[0].mxu0
        %v724 = vadd.f32 %v628, %v723
        %v725 = vpop.f32.mrb[0].mxu0
        %v726 = vadd.f32 %v628, %v725
        %727 = vmatprep.mubr.f32.mxu0 0.0
        %728 = vmatmul.mubr.f32.gmra.mrb[0].mxu0 %v649
        %v729 = vpop.f32.mrb[0].mxu0
        %v730 = vadd.f32 %v633, %v729
        %v731 = vpop.f32.mrb[0].mxu0
        %v732 = vadd.f32 %v633, %v731
        %733 = vmatprep.mubr.f32.mxu0 0.0
        %734 = vmatmul.mubr.f32.gmra.mrb[0].mxu0 %v652
        %v735 = vpop.f32.mrb[0].mxu0
        %v736 = vadd.f32 %v638, %v735
        %v737 = vpop.f32.mrb[0].mxu0
        %v738 = vadd.f32 %v638, %v737
        %739 = vmatprep.mubr.f32.mxu0 0.0
        %740 = vmatmul.mubr.f32.gmra.mrb[0].mxu0 %v655
        %v741 = vpop.f32.mrb[0].mxu0
        %v742 = vadd.f32 %v643, %v741
        %v743 = vpop.f32.mrb[0].mxu0
        %v744 = vadd.f32 %v643, %v743
        %745 = vdwg.mxu0
        %v746 = vmax.f32 %v724, 0.0
        %v747 = vmax.f32 %v726, 0.0
        %v748 = vmax.f32 %v730, 0.0
        %v749 = vmax.f32 %v732, 0.0
        %v750 = vmax.f32 %v736, 0.0
        %v751 = vmax.f32 %v738, 0.0
        %v752 = vmax.f32 %v742, 0.0
        %v753 = vmax.f32 %v744, 0.0
        %v754 = vadd.f32 %v746, %v607
        %v755 = vadd.f32 %v747, %v608
        %v756 = vadd.f32 %v748, %v609
        %v757 = vadd.f32 %v749, %v610
        %v758 = vadd.f32 %v750, %v611
        %v759 = vadd.f32 %v751, %v612
        %v760 = vadd.f32 %v752, %v613
        %v761 = vadd.f32 %v753, %v614
        %v762 = vld [vmem:[%s5] sm:$0x1]
        %v763 = vld [vmem:[#allocation2] sm:$0x1]
        %765 = vset.pattern.permute.xlu0 0
        %766 = vperm.xlu0 %765, %v763
        %v767 = vpop.permute.xlu0 %766
        %v769 = vlaneseq
        %v770 = vshrl.u32 %v769, 7
        %v771 = vsub.s32 0, %v770
        %v772 = vrot.slane %v767, %v771
        %v774 = vsel %vm497, %v762, 0
        %776 = vmatprep.subr.mxu0 %v755
        %777 = vmatpush1.msra.mxu0 %v754
        %778 = vmatprep.subr.mxu0 %v757
        %779 = vmatpush1.msra.mxu0 %v756
        %780 = vmatprep.subr.mxu0 %v759
        %781 = vmatpush1.msra.mxu0 %v758
        %782 = vmatprep.subr.mxu0 %v761
        %783 = vmatpush1.msra.mxu0 %v760
        %784 = vmatprep.subr.mxu0 0.0
        %785 = vmatpush1.msra.mxu0 0.0
        %786 = vmatprep.subr.mxu0 0.0
        %787 = vmatpush1.msra.mxu0 0.0
        %788 = vmatprep.subr.mxu0 0.0
        %789 = vmatpush1.msra.mxu0 0.0
        %790 = vmatprep.subr.mxu0 0.0
        %791 = vmatpush1.msra.mxu0 0.0
        %792 = vmatprep.subr.mxu0 0.0
        %793 = vmatpush1.msra.mxu0 0.0
        %794 = vmatprep.subr.mxu0 0.0
        %795 = vmatpush1.msra.mxu0 0.0
        %796 = vmatprep.subr.mxu0 0.0
        %797 = vmatpush1.msra.mxu0 0.0
        %798 = vmatprep.subr.mxu0 0.0
        %799 = vmatpush1.msra.mxu0 0.0
        %800 = vmatprep.subr.mxu0 0.0
        %801 = vmatpush1.msra.mxu0 0.0
        %802 = vmatprep.subr.mxu0 0.0
        %803 = vmatpush1.msra.mxu0 0.0
        %804 = vmatprep.subr.mxu0 0.0
        %805 = vmatpush1.msra.mxu0 0.0
        %806 = vmatprep.subr.mxu0 0.0
        %807 = vmatpush1.msra.mxu0 0.0
        %808 = vmatprep.subr.mxu0 0.0
        %809 = vmatpush1.msra.mxu0 0.0
        %810 = vmatprep.subr.mxu0 0.0
        %811 = vmatpush1.msra.mxu0 0.0
        %812 = vmatprep.subr.mxu0 0.0
        %813 = vmatpush1.msra.mxu0 0.0
        %814 = vmatprep.subr.mxu0 0.0
        %815 = vmatpush1.msra.mxu0 0.0
        %816 = vmatprep.subr.mxu0 0.0
        %817 = vmatpush1.msra.mxu0 0.0
        %818 = vmatprep.subr.mxu0 0.0
        %819 = vmatpush1.msra.mxu0 0.0
        %820 = vmatprep.subr.mxu0 0.0
        %821 = vmatpush1.msra.mxu0 0.0
        %822 = vmatprep.subr.mxu0 0.0
        %823 = vmatpush1.msra.mxu0 0.0
        %824 = vmatprep.subr.mxu0 0.0
        %825 = vmatpush1.msra.mxu0 0.0
        %826 = vmatprep.subr.mxu0 0.0
        %827 = vmatpush1.msra.mxu0 0.0
        %828 = vmatprep.subr.mxu0 0.0
        %829 = vmatpush1.msra.mxu0 0.0
        %830 = vmatprep.subr.mxu0 0.0
        %831 = vmatpush1.msra.mxu0 0.0
        %832 = vmatprep.subr.mxu0 0.0
        %833 = vmatpush1.msra.mxu0 0.0
        %834 = vmatprep.subr.mxu0 0.0
        %835 = vmatpush1.msra.mxu0 0.0
        %836 = vmatprep.subr.mxu0 0.0
        %837 = vmatpush1.msra.mxu0 0.0
        %838 = vmatprep.subr.mxu0 0.0
        %839 = vmatpush1.msra.mxu0 0.0
        %840 = vmatprep.mubr.f32.mxu0 0.0
        %841 = vmatmul.mubr.f32.gmra.mrb[0].mxu0 %v774
        %v842 = vpop.f32.mrb[0].mxu0
        %v843 = vadd.f32 %v772, %v842
        %v844 = vpop.f32.mrb[0].mxu0
        %v845 = vadd.f32 %v772, %v844
        %846 = vdwg.mxu0
        %s847 = sld [smem:[#allocation3]]
        %v848 = vstv %s847
        %v849 = vmul.f32 %v843, %v848
        %v850 = vmul.f32 %v845, %v848
        %v853 = vcombine.low %v849, %v850
        %v855 = vunpack.c.l.s4 1966171168
        %v856 = vunpack.c.0.s8 %v855
        %v857 = vlaneseq
        %v858 = vshrl.u32 %v857, 7
        %v859 = vsub.s32 %v856, %v858
        %v860 = vrot.slane %v853, %v859
        %v862 = vunpack.c.l.s4 1966171168
        %v863 = vunpack.c.0.s8 %v862
        %v864 = vlaneseq
        %v865 = vshrl.u32 %v864, 7
        %v866 = vsub.s32 %v863, %v865
        %v867 = vrot.slane %v860, %v866
        %v869 = vlaneseq
        %vm870 = vcmp.ge.s32.totalorder %v869, 0
        %vm871 = vcmp.lt.s32.totalorder %v869, 256
        %vm872 = vmand %vm870, %vm871
        %873 = vst.msk [vmem:[%s332] sm:$0x3] %vm872, %v867
        %s874 = sand.u32 %s206, 1
        %s875 = scalar_lea.sflag [#allocation6], %s874
        %s876 = sand.u32 %s206, 1
        %s877 = smul.addr %s876, 2
        %s878 = scalar_lea.vmem [#allocation5], %s877
        // Predicated region
        $region76: #{tpu_custom_call.1} parent=70 // pred_check
          %p879 = pneg %p216
        $region77: #{tpu_custom_call.1} parent=70 // pred_check_branch
          %881 = sbr.rel (%p879) target = $region79
        $region78: #{tpu_custom_call.1} parent=70 // pred_region
          %s882 = smul.u32 2, %s25
          %s884 = ssub.s32 32, 32
          %885 = vsyncadd %s875, %s884
          %s886 = smul.addr %s882, 16
          %s887 = scalar_lea.hbm %s8, %s886
          %s889 = sshll.u32 %s878, 4
          %s890 = int_to_ptr.vmem [resolvable:$true] %s889
          %892 = dma.vmem_to_hbm [thread:$0]  %s890, 32, %s887, %s875
        $region79: #{tpu_custom_call.1} parent=70 // pred_fallthru
          _
      $region71: #{tpu_custom_call.1} parent=5 // pred_fallthru
        _
      %p893 = scmp.le.s32.totalorder 2, %s20
      // Predicated region
      $region80: #{tpu_custom_call.1} parent=5 // pred_check
        %p894 = pneg %p893
      $region81: #{tpu_custom_call.1} parent=5 // pred_check_branch
        %896 = sbr.rel (%p894) target = $region83
      $region82: #{tpu_custom_call.1} parent=5 // pred_region
        %s897 = ssub.s32 %s20, 2
        // Predicated region
        $region84: #{tpu_custom_call.1} parent=82 // pred_check
          %p898 = pneg %p222
        $region85: #{tpu_custom_call.1} parent=82 // pred_check_branch
          %900 = sbr.rel (%p898) target = $region87
        $region86: #{tpu_custom_call.1} parent=82 // pred_region
          %s901 = sand.u32 %s207, 1
          %s902 = scalar_lea.sflag [#allocation6], %s901
          %s903 = sand.u32 %s207, 1
          %s904 = smul.addr %s903, 2
          %s905 = scalar_lea.vmem [#allocation5], %s904
          %906 = dma.done %s902, 32
        $region87: #{tpu_custom_call.1} parent=82 // pred_fallthru
          _
      $region83: #{tpu_custom_call.1} parent=5 // pred_fallthru
        _
    $region6: #{tpu_custom_call.1} parent=1 // loop_footer
      %s24 = sadd.s32 1, %s20
    $region7: #{tpu_custom_call.1} parent=1 // loop_footer_branch
      %19 = sbr.rel target = $region3
    $region8: #{tpu_custom_call.1} parent=1 // loop_exit
      _
    %907 = vsyncpa [#allocation6], 1
    %s908 = scalar_lea.sflag [#allocation6], 1
    %909 = vsyncpa %s908, 1

</llo_original>
